<compile_context>
chip_gen: v7x
topology: tpu7x:2x2x1
jax: 0.10.0
libtpu: 0.0.40
codegen_flags: <defaults>
</compile_context>

<pallas_src>
import functools

import jax
import jax.numpy as jnp
from jax.experimental import pallas as pl
from jax.experimental.pallas import tpu as pltpu

_LANES = 128
_SUBLANES = 8


def _round_up(x, m):
    return ((x + m - 1) // m) * m


def _pack_lane_dense(x, row_multiple):
    """Flatten to f32 and repack into a zero-padded, lane-dense (rows, 128) slab."""
    flat = jnp.ravel(x).astype(jnp.float32)
    n = flat.shape[0]
    rows = _round_up(max(-(-n // _LANES), 1), row_multiple)
    pad = rows * _LANES - n
    if pad:
        flat = jnp.pad(flat, (0, pad))
    return flat.reshape(rows, _LANES)


def _error_kernel(p_ref, pe_ref, v_ref, ve_ref, o_ref, acc_ref, *, inv_n):
    pid = pl.program_id(0)

    # First grid step: zero the lane-shaped accumulator.
    @pl.when(pid == 0)
    def _init():
        acc_ref[...] = jnp.zeros_like(acc_ref)

    # Every step: pure elementwise VALU/EUP work (mul + log + add), no reduce.
    # Padded entries have p == 0, so they contribute exactly 0 (log(1e-8) finite).
    acc_ref[...] += p_ref[...] * jnp.log(jnp.float32(1e-8) + pe_ref[...])

    # Last grid step: single cross-lane reduce + value term + mean (mul by 1/B).
    @pl.when(pid == pl.num_programs(0) - 1)
    def _finalize():
        d = v_ref[...] - ve_ref[...]                       # padding: 0 - 0
        policy_sum = jnp.sum(acc_ref[...], keepdims=True)  # (1, 1)
        value_sum = jnp.sum(d * d, keepdims=True)          # (1, 1)
        o_ref[...] = (policy_sum + value_sum) * inv_n


def error_fnc(value, value_estimate, policy, policy_estimate, *, block_rows=2048):
    """Pallas implementation of ErrorFnc.forward. Returns a scalar f32."""
    B, A = policy.shape
    if value.size != B or value_estimate.size != B:
        raise ValueError(
            "value / value_estimate must have exactly B elements to match the "
            "PyTorch semantics (value_error.view(-1) + policy_error)."
        )

    block_rows = _round_up(max(int(block_rows), _SUBLANES), _SUBLANES)
    rows_needed = _round_up(max(-(-(B * A) // _LANES), 1), _SUBLANES)
    blk = min(block_rows, rows_needed)

    # Lane-dense, zero-padded slabs (padding contributes 0 to all sums).
    p_slab = _pack_lane_dense(policy, blk)
    pe_slab = _pack_lane_dense(policy_estimate, blk)
    v_slab = _pack_lane_dense(value, _SUBLANES)
    ve_slab = _pack_lane_dense(value_estimate, _SUBLANES)

    rows = p_slab.shape[0]
    grid = (rows // blk,)

    kernel = functools.partial(_error_kernel, inv_n=float(1.0 / B))

    out = pl.pallas_call(
        kernel,
        out_shape=jax.ShapeDtypeStruct((1, 1), jnp.float32),
        grid_spec=pltpu.PrefetchScalarGridSpec(
            num_scalar_prefetch=0,
            grid=grid,
            in_specs=[
                pl.BlockSpec((blk, _LANES), lambda i: (i, 0)),   # policy slab
                pl.BlockSpec((blk, _LANES), lambda i: (i, 0)),   # policy_estimate slab
                pl.BlockSpec(v_slab.shape, lambda i: (0, 0)),    # value slab (resident)
                pl.BlockSpec(ve_slab.shape, lambda i: (0, 0)),   # value_estimate slab
            ],
            out_specs=pl.BlockSpec((1, 1), lambda i: (0, 0)),
            scratch_shapes=[pltpu.VMEM((blk, _LANES), jnp.float32)],
        ),
        compiler_params=pltpu.CompilerParams(
            dimension_semantics=("arbitrary",),
        ),
    )(p_slab, pe_slab, v_slab, ve_slab)
    return out[0, 0]


def _reference(value, value_estimate, policy, policy_estimate):
    value_error = (value - value_estimate) ** 2
    policy_error = jnp.sum(
        policy * jnp.log(1e-8 + policy_estimate.astype(jnp.float32)), axis=1
    )
    return jnp.mean(value_error.reshape(-1).astype(jnp.float32) + policy_error)


if __name__ == "__main__":
    key = jax.random.PRNGKey(0)
    k1, k2, k3, k4, k5, k6, k7, k8 = jax.random.split(key, 8)

    # --- tiny case (single grid step) ---------------------------------------
    B, A = 8, 32
    value = jax.random.normal(k1, (B, 1), dtype=jnp.float32)
    value_estimate = jax.random.normal(k2, (B, 1), dtype=jnp.float32)
    policy = jax.nn.softmax(jax.random.normal(k3, (B, A), dtype=jnp.float32), axis=1)
    policy_estimate = jax.nn.softmax(
        jax.random.normal(k4, (B, A), dtype=jnp.float32), axis=1
    )

    out = jax.block_until_ready(
        error_fnc(value, value_estimate, policy, policy_estimate)
    )
    ref = jax.block_until_ready(
        _reference(value, value_estimate, policy, policy_estimate)
    )
    assert jnp.allclose(out, ref, rtol=1e-5, atol=1e-5), (out, ref)

    # --- larger, unaligned case exercising the batched grid + padding -------
    B2, A2 = 96, 200
    value2 = jax.random.normal(k5, (B2, 1), dtype=jnp.float32)
    value_estimate2 = jax.random.normal(k6, (B2, 1), dtype=jnp.float32)
    policy2 = jax.nn.softmax(jax.random.normal(k7, (B2, A2), dtype=jnp.float32), axis=1)
    policy_estimate2 = jax.nn.softmax(
        jax.random.normal(k8, (B2, A2), dtype=jnp.float32), axis=1
    )

    out2 = jax.block_until_ready(
        error_fnc(value2, value_estimate2, policy2, policy_estimate2, block_rows=16)
    )
    ref2 = jax.block_until_ready(
        _reference(value2, value_estimate2, policy2, policy_estimate2)
    )
    assert jnp.allclose(out2, ref2, rtol=1e-4, atol=1e-4), (out2, ref2)

    print("KERNEL_OK")
</pallas_src>

<mosaic_0001>
module attributes {stable_mosaic.version = 11 : i64} {
  func.func @_error_kernel(%arg0: i32, %arg1: memref<8x128xf32, #tpu.memory_space<vmem>>, %arg2: memref<8x128xf32, #tpu.memory_space<vmem>>, %arg3: memref<8x128xf32, #tpu.memory_space<vmem>>, %arg4: memref<8x128xf32, #tpu.memory_space<vmem>>, %arg5: memref<1x1xf32, #tpu.memory_space<vmem>>, %arg6: memref<8x128xf32, #tpu.memory_space<vmem>>) attributes {dimension_semantics = [#tpu.dimension_semantics<arbitrary>], iteration_bounds = array<i64: 1>, scalar_prefetch = 0 : i64, scratch_operands = 1 : i64, tpu.core_type = #tpu.core_type<tc>, window_params = [{transform_indices = @transform_0, window_bounds = array<i64: 8, 128>}, {transform_indices = @transform_1, window_bounds = array<i64: 8, 128>}, {pipeline_mode = #tpu.pipeline_mode<synchronous>, transform_indices = @transform_2, window_bounds = array<i64: 8, 128>}, {pipeline_mode = #tpu.pipeline_mode<synchronous>, transform_indices = @transform_3, window_bounds = array<i64: 8, 128>}, {pipeline_mode = #tpu.pipeline_mode<synchronous>, transform_indices = @transform_4, window_bounds = array<i64: 1, 1>}]} {
    %c0_i32 = arith.constant 0 : i32
    %0 = arith.cmpi eq, %arg0, %c0_i32 : i32
    %1 = arith.extui %0 : i1 to i32
    %c0_i32_0 = arith.constant 0 : i32
    %2 = arith.cmpi ne, %1, %c0_i32_0 : i32
    scf.if %2 {
      %cst_10 = arith.constant 0.000000e+00 : f32
      %15 = vector.broadcast %cst_10 : f32 to vector<8x128xf32>
      %c0_11 = arith.constant 0 : index
      %c0_12 = arith.constant 0 : index
      %16 = vector.load %arg6[%c0_11, %c0_12] : memref<8x128xf32, #tpu.memory_space<vmem>>, vector<8x128xf32>
      tpu.vector_store %arg6[%c0_11, %c0_12], %15 {strides = array<i32>} : memref<8x128xf32, #tpu.memory_space<vmem>>, vector<8x128xf32>,
    } else {
    }
    %c0 = arith.constant 0 : index
    %c0_1 = arith.constant 0 : index
    %3 = vector.load %arg6[%c0, %c0_1] : memref<8x128xf32, #tpu.memory_space<vmem>>, vector<8x128xf32>
    %c0_2 = arith.constant 0 : index
    %c0_3 = arith.constant 0 : index
    %4 = vector.load %arg1[%c0_2, %c0_3] : memref<8x128xf32, #tpu.memory_space<vmem>>, vector<8x128xf32>
    %c0_4 = arith.constant 0 : index
    %c0_5 = arith.constant 0 : index
    %5 = vector.load %arg2[%c0_4, %c0_5] : memref<8x128xf32, #tpu.memory_space<vmem>>, vector<8x128xf32>
    %cst = arith.constant 9.99999993E-9 : f32
    %6 = vector.broadcast %cst : f32 to vector<8x128xf32>
    %7 = arith.addf %6, %5 : vector<8x128xf32>
    %8 = math.log %7 : vector<8x128xf32>
    %9 = arith.mulf %4, %8 : vector<8x128xf32>
    %10 = arith.addf %3, %9 : vector<8x128xf32>
    %c0_6 = arith.constant 0 : index
    %c0_7 = arith.constant 0 : index
    %11 = vector.load %arg6[%c0_6, %c0_7] : memref<8x128xf32, #tpu.memory_space<vmem>>, vector<8x128xf32>
    tpu.vector_store %arg6[%c0_6, %c0_7], %10 {strides = array<i32>} : memref<8x128xf32, #tpu.memory_space<vmem>>, vector<8x128xf32>,
    %c0_i32_8 = arith.constant 0 : i32
    %12 = arith.cmpi eq, %arg0, %c0_i32_8 : i32
    %13 = arith.extui %12 : i1 to i32
    %c0_i32_9 = arith.constant 0 : i32
    %14 = arith.cmpi ne, %13, %c0_i32_9 : i32
    scf.if %14 {
      %c0_10 = arith.constant 0 : index
      %c0_11 = arith.constant 0 : index
      %15 = vector.load %arg3[%c0_10, %c0_11] : memref<8x128xf32, #tpu.memory_space<vmem>>, vector<8x128xf32>
      %c0_12 = arith.constant 0 : index
      %c0_13 = arith.constant 0 : index
      %16 = vector.load %arg4[%c0_12, %c0_13] : memref<8x128xf32, #tpu.memory_space<vmem>>, vector<8x128xf32>
      %17 = arith.subf %15, %16 : vector<8x128xf32>
      %c0_14 = arith.constant 0 : index
      %c0_15 = arith.constant 0 : index
      %18 = vector.load %arg6[%c0_14, %c0_15] : memref<8x128xf32, #tpu.memory_space<vmem>>, vector<8x128xf32>
      %19 = vector.shape_cast %18 : vector<8x128xf32> to vector<1x8x128xf32>
      %cst_16 = arith.constant dense<0.000000e+00> : vector<1xf32>
      %20 = vector.multi_reduction <add>, %19, %cst_16 [1, 2] : vector<1x8x128xf32> to vector<1xf32>
      %21 = vector.shape_cast %20 : vector<1xf32> to vector<1x1x1xf32>
      %22 = vector.extract %21[0, 0, 0] : f32 from vector<1x1x1xf32>
      %23 = vector.broadcast %22 : f32 to vector<1x1xf32>
      %24 = arith.mulf %17, %17 : vector<8x128xf32>
      %25 = vector.shape_cast %24 : vector<8x128xf32> to vector<1x8x128xf32>
      %cst_17 = arith.constant dense<0.000000e+00> : vector<1xf32>
      %26 = vector.multi_reduction <add>, %25, %cst_17 [1, 2] : vector<1x8x128xf32> to vector<1xf32>
      %27 = vector.shape_cast %26 : vector<1xf32> to vector<1x1x1xf32>
      %28 = vector.extract %27[0, 0, 0] : f32 from vector<1x1x1xf32>
      %29 = vector.broadcast %28 : f32 to vector<1x1xf32>
      %30 = arith.addf %23, %29 : vector<1x1xf32>
      %cst_18 = arith.constant 1.250000e-01 : f32
      %31 = vector.broadcast %cst_18 : f32 to vector<1x1xf32>
      %32 = arith.mulf %30, %31 : vector<1x1xf32>
      %c0_19 = arith.constant 0 : index
      %c0_20 = arith.constant 0 : index
      %33 = vector.load %arg5[%c0_19, %c0_20] : memref<1x1xf32, #tpu.memory_space<vmem>>, vector<1x1xf32>
      tpu.vector_store %arg5[%c0_19, %c0_20], %32 {strides = array<i32>} : memref<1x1xf32, #tpu.memory_space<vmem>>, vector<1x1xf32>,
    } else {
    }
    return
  }
  func.func @transform_0(%arg0: i32) -> (i32, i32) {
    %c0_i32 = arith.constant 0 : i32
    %c0_i32_0 = arith.constant 0 : i32
    return %arg0, %c0_i32 : i32, i32
  }
  func.func @transform_1(%arg0: i32) -> (i32, i32) {
    %c0_i32 = arith.constant 0 : i32
    %c0_i32_0 = arith.constant 0 : i32
    return %arg0, %c0_i32 : i32, i32
  }
  func.func @transform_2(%arg0: i32) -> (i32, i32) {
    %c0_i32 = arith.constant 0 : i32
    %c0_i32_0 = arith.constant 0 : i32
    %c0_i32_1 = arith.constant 0 : i32
    return %c0_i32, %c0_i32_0 : i32, i32
  }
  func.func @transform_3(%arg0: i32) -> (i32, i32) {
    %c0_i32 = arith.constant 0 : i32
    %c0_i32_0 = arith.constant 0 : i32
    %c0_i32_1 = arith.constant 0 : i32
    return %c0_i32, %c0_i32_0 : i32, i32
  }
  func.func @transform_4(%arg0: i32) -> (i32, i32) {
    %c0_i32 = arith.constant 0 : i32
    %c0_i32_0 = arith.constant 0 : i32
    %c0_i32_1 = arith.constant 0 : i32
    return %c0_i32, %c0_i32_0 : i32, i32
  }
}

</mosaic_0001>

<llo_original>
// kernel: tpu_custom_call.1
$region0: #{tpu_custom_call.1}
  #allocation0 [shape = 'u32[]', space=smem, size = 0x4, offset = 0x4, fixed_abs, tag = 'smem constant byte address 0x4 - core index']
  #allocation1 [shape = 'u32[144,128]{1,0:T(1,128)}', space=vmem, size = 0x12000, scoped, tag = 'internal scratch']
  #allocation2 [shape = 'f32[8,128]{1,0:T(8,128)}', space=vmem, size = 0x1000, scoped, tag = 'scratch operand']
  %s0 = inlined_call_operand.hbm [shape: f32[8,128], index: 0, kind: input, shape index: {}]
  %s1 = inlined_call_operand.hbm [shape: f32[8,128], index: 1, kind: input, shape index: {}]
  %s2 = inlined_call_operand.hbm [shape: f32[8,128], index: 2, kind: input, shape index: {}]
  %s3 = inlined_call_operand.vmem [shape: f32[8,128], index: 3, kind: input, shape index: {}]
  %s4 = inlined_call_operand.hbm [shape: f32[1,1], index: 4, kind: output, shape index: {}]
  %s5 = sld [smem:[#allocation0]]
  $region46: #{tpu_custom_call.1} parent=0
    _
  %s7 = ssub.s32 1, %s5
  %s8 = scalar_select 0, %s7, %s5
  $region1: #{tpu_custom_call.1} parent=0
    #allocation3 [shape = 'u8[4096]{0}', space=vmem, size = 0x1000, scoped, tag = 'input window, operand 0, single buffered']
    #allocation4 [shape = 's32[1]{0}', space=sflag, size = 0x4, scoped, tag = 'scoped memory for tpu_custom_call.1']
    #allocation5 [shape = 's32[1]{0}', space=sflag, size = 0x4, scoped, tag = 'scoped memory for tpu_custom_call.1']
    #allocation6 [shape = 'u8[4096]{0}', space=vmem, size = 0x1000, scoped, tag = 'input window, operand 1, single buffered']
    #allocation7 [shape = 's32[1]{0}', space=sflag, size = 0x4, scoped, tag = 'scoped memory for tpu_custom_call.1']
    #allocation8 [shape = 'u8[4096]{0}', space=vmem, size = 0x1000, scoped, tag = 'input window, operand 2, single buffered']
    #allocation9 [shape = 'u8[512]{0}', space=vmem, size = 0x400, scoped, tag = 'output window, operand 0, single buffered']
    %9 = vsyncpa [#allocation4], 0
    %10 = vsyncpa [#allocation7], 0
    %11 = vsyncpa [#allocation5], 0
    // Predicated region
    $region2: #{tpu_custom_call.1} parent=1 // pred_check
      _
    $region3: #{tpu_custom_call.1} parent=1 // pred_check_branch
      %13 = sbr.rel (0) target = $region5
    $region4: #{tpu_custom_call.1} parent=1 // pred_region
      %s15 = ssub.s32 128, 128
      %16 = vsyncadd [#allocation4], %s15
      %s18 = sshll.u32 [#allocation3], 4
      %s19 = int_to_ptr.vmem [resolvable:$true] %s18
      %21 = dma.hbm_to_vmem [thread:$0]  %s0, 128, %s19, [#allocation4]
    $region5: #{tpu_custom_call.1} parent=1 // pred_fallthru
      _
    // Predicated region
    $region6: #{tpu_custom_call.1} parent=1 // pred_check
      _
    $region7: #{tpu_custom_call.1} parent=1 // pred_check_branch
      %23 = sbr.rel (0) target = $region9
    $region8: #{tpu_custom_call.1} parent=1 // pred_region
      %s25 = ssub.s32 128, 128
      %26 = vsyncadd [#allocation7], %s25
      %s28 = sshll.u32 [#allocation6], 4
      %s29 = int_to_ptr.vmem [resolvable:$true] %s28
      %31 = dma.hbm_to_vmem [thread:$0]  %s1, 128, %s29, [#allocation7]
    $region9: #{tpu_custom_call.1} parent=1 // pred_fallthru
      _
    // Predicated region
    $region10: #{tpu_custom_call.1} parent=1 // pred_check
      _
    $region11: #{tpu_custom_call.1} parent=1 // pred_check_branch
      %33 = sbr.rel (0) target = $region13
    $region12: #{tpu_custom_call.1} parent=1 // pred_region
      %s35 = ssub.s32 128, 128
      %36 = vsyncadd [#allocation7], %s35
      %s38 = sshll.u32 [#allocation8], 4
      %s39 = int_to_ptr.vmem [resolvable:$true] %s38
      %41 = dma.hbm_to_vmem [thread:$0]  %s2, 128, %s39, [#allocation7]
    $region13: #{tpu_custom_call.1} parent=1 // pred_fallthru
      _
    // Predicated region
    $region14: #{tpu_custom_call.1} parent=1 // pred_check
      _
    $region15: #{tpu_custom_call.1} parent=1 // pred_check_branch
      %43 = sbr.rel (0) target = $region17
    $region16: #{tpu_custom_call.1} parent=1 // pred_region
      _
    $region17: #{tpu_custom_call.1} parent=1 // pred_fallthru
      _
    // Predicated region
    $region18: #{tpu_custom_call.1} parent=1 // pred_check
      _
    $region19: #{tpu_custom_call.1} parent=1 // pred_check_branch
      %45 = sbr.rel (0) target = $region21
    $region20: #{tpu_custom_call.1} parent=1 // pred_region
      %46 = dma.done [#allocation4], 128
    $region21: #{tpu_custom_call.1} parent=1 // pred_fallthru
      _
    // Predicated region
    $region22: #{tpu_custom_call.1} parent=1 // pred_check
      _
    $region23: #{tpu_custom_call.1} parent=1 // pred_check_branch
      %48 = sbr.rel (0) target = $region25
    $region24: #{tpu_custom_call.1} parent=1 // pred_region
      %49 = dma.done [#allocation7], 128
    $region25: #{tpu_custom_call.1} parent=1 // pred_fallthru
      _
    // Predicated region
    $region26: #{tpu_custom_call.1} parent=1 // pred_check
      _
    $region27: #{tpu_custom_call.1} parent=1 // pred_check_branch
      %51 = sbr.rel (0) target = $region29
    $region28: #{tpu_custom_call.1} parent=1 // pred_region
      %52 = dma.done [#allocation7], 128
    $region29: #{tpu_custom_call.1} parent=1 // pred_fallthru
      _
    %p53 = scmp.eq.s32.totalorder 0, 0
    // Predicated region
    $region30: #{tpu_custom_call.1} parent=1 // pred_check
      %p54 = pneg %p53
    $region31: #{tpu_custom_call.1} parent=1 // pred_check_branch
      %56 = sbr.rel (%p54) target = $region33
    $region32: #{tpu_custom_call.1} parent=1 // pred_region
      %57 = vst [vmem:[#allocation2] sm:$0xff] 0.0
    $region33: #{tpu_custom_call.1} parent=1 // pred_fallthru
      _
    %v58 = vld [vmem:[#allocation2] sm:$0xff]
    %v59 = vld [vmem:[#allocation3] sm:$0xff]
    %v60 = vld [vmem:[#allocation6] sm:$0xff]
    %v61 = vadd.f32 %v60, 1e-08
    %v62 = vlog2.pop %v61
    %v63 = vmul.f32 %v62, 0.6931472
    %v64 = vmul.f32 %v59, %v63
    %v65 = vadd.f32 %v58, %v64
    %66 = vst [vmem:[#allocation2] sm:$0xff] %v65
    // Predicated region
    $region34: #{tpu_custom_call.1} parent=1 // pred_check
      %p67 = pneg %p53
    $region35: #{tpu_custom_call.1} parent=1 // pred_check_branch
      %69 = sbr.rel (%p67) target = $region37
    $region36: #{tpu_custom_call.1} parent=1 // pred_region
      %v70 = vld [vmem:[#allocation8] sm:$0xff]
      %v71 = vld [vmem:[%s3] sm:$0xff]
      %v72 = vsub.f32 %v70, %v71
      %v73 = vld [vmem:[#allocation2] sm:$0xff]
      %74 = vadd.xlane.f32.xlu0 %v73
      %v75 = vpop.xlane.xlu0 %74
      %v76 = vrot.slane %v75, 4
      %v77 = vadd.f32 %v75, %v76
      %v78 = vrot.slane %v77, 2
      %v79 = vadd.f32 %v77, %v78
      %v80 = vrot.slane %v79, 1
      %v81 = vadd.f32 %v79, %v80
      %s82 = vtos %v81
      %v83 = vstv %s82
      %v84 = vmul.f32 %v72, %v72
      %85 = vadd.xlane.f32.xlu0 %v84
      %v86 = vpop.xlane.xlu0 %85
      %v87 = vrot.slane %v86, 4
      %v88 = vadd.f32 %v86, %v87
      %v89 = vrot.slane %v88, 2
      %v90 = vadd.f32 %v88, %v89
      %v91 = vrot.slane %v90, 1
      %v92 = vadd.f32 %v90, %v91
      %s93 = vtos %v92
      %v94 = vstv %s93
      %v95 = vadd.f32 %v83, %v94
      %v96 = vmul.f32 %v95, 0.125
      %vm97 = vcmask 0
      %98 = vst.msk [vmem:[#allocation9] sm:$0x1] %vm97, %v96
    $region37: #{tpu_custom_call.1} parent=1 // pred_fallthru
      _
    // Predicated region
    $region38: #{tpu_custom_call.1} parent=1 // pred_check
      _
    $region39: #{tpu_custom_call.1} parent=1 // pred_check_branch
      %100 = sbr.rel (0) target = $region41
    $region40: #{tpu_custom_call.1} parent=1 // pred_region
      %s102 = ssub.s32 16, 16
      %103 = vsyncadd [#allocation5], %s102
      %s105 = sshll.u32 [#allocation9], 4
      %s106 = int_to_ptr.vmem [resolvable:$true] %s105
      %108 = dma.vmem_to_hbm [thread:$0]  %s106, 16, %s4, [#allocation5]
    $region41: #{tpu_custom_call.1} parent=1 // pred_fallthru
      _
    // Predicated region
    $region42: #{tpu_custom_call.1} parent=1 // pred_check
      _
    $region43: #{tpu_custom_call.1} parent=1 // pred_check_branch
      %110 = sbr.rel (0) target = $region45
    $region44: #{tpu_custom_call.1} parent=1 // pred_region
      %111 = dma.done [#allocation5], 16
    $region45: #{tpu_custom_call.1} parent=1 // pred_fallthru
      _
    %112 = vsyncpa [#allocation4], 1
    %113 = vsyncpa [#allocation7], 1
    %114 = vsyncpa [#allocation5], 1

</llo_original>
